<compile_context>
chip_gen: v5e
topology: v5e:2x2
jax: 0.10.0
libtpu: 0.0.40
codegen_flags: <defaults>
</compile_context>

<pallas_src>
import math
import functools
import jax
import jax.numpy as jnp
from jax import lax
from jax.experimental import pallas as pl
from jax.experimental.pallas import tpu as pltpu


# ---------------------------------------------------------------------------
# helpers
# ---------------------------------------------------------------------------

def _round_up(x, m):
    return ((x + m - 1) // m) * m


def _gelu_exact(x):
    # nn.GELU() default is the exact erf formulation.
    return 0.5 * x * (1.0 + lax.erf(x * (1.0 / math.sqrt(2.0))))


_RESIDENT_VMEM_BUDGET = 36 * 1024 * 1024   # decision threshold for fast path
_VMEM_LIMIT_CAP = 48 * 1024 * 1024         # stays well under v7x's 64 MiB


def _resident_vmem_bytes(tm, D, H, bpe):
    """Rough VMEM footprint of the weights-resident path (double-buffered)."""
    return (2 * tm * D * bpe          # x tile (double-buffered)
            + 2 * 2 * D * H * bpe     # W_fc + W_proj (double-buffered)
            + 2 * tm * D * 4          # f32 output tile (double-buffered)
            + 2 * tm * H * 4          # pre / act f32 intermediates
            + 2 * (H + D) * 4)        # biases


def _pick_th(H, requested=512):
    """Hidden tile for the reduction path: lane-dense and exactly divides H."""
    if H <= requested:
        return H
    for cand in (requested, 512, 384, 256, 1024, 128):
        if cand <= H and H % cand == 0 and cand % 128 == 0:
            return cand
    return H  # fallback: no H tiling


# ---------------------------------------------------------------------------
# kernels
# ---------------------------------------------------------------------------

def mlp_kernel_resident(x_ref, w1_ref, b1_ref, w2_ref, b2_ref, o_ref):
    # x_ref:  (tm, D) bf16   w1_ref: (D, H) bf16   b1_ref: (1, H) f32
    # w2_ref: (H, D) bf16    b2_ref: (1, D) f32    o_ref:  (tm, D) f32
    pre = jnp.dot(x_ref[...], w1_ref[...],
                  preferred_element_type=jnp.float32) + b1_ref[...]
    act = _gelu_exact(pre)
    out = jnp.dot(act.astype(w2_ref.dtype), w2_ref[...],
                  preferred_element_type=jnp.float32) + b2_ref[...]
    o_ref[...] = out.astype(o_ref.dtype)


def mlp_kernel_tiled(x_ref, w1_ref, b1_ref, w2_ref, b2_ref, o_ref, acc_ref):
    # Fallback path: hidden dim H tiled (reduction axis), f32 accumulator.
    h = pl.program_id(1)

    @pl.when(h == 0)
    def _():
        acc_ref[...] = jnp.zeros_like(acc_ref)

    pre = jnp.dot(x_ref[...], w1_ref[...],
                  preferred_element_type=jnp.float32) + b1_ref[...]
    act = _gelu_exact(pre)
    acc_ref[...] += jnp.dot(act.astype(w2_ref.dtype), w2_ref[...],
                            preferred_element_type=jnp.float32)

    @pl.when(h == pl.num_programs(1) - 1)
    def _():
        # c_proj bias added exactly once, at finalize.
        o_ref[...] = (acc_ref[...] + b2_ref[...]).astype(o_ref.dtype)


# ---------------------------------------------------------------------------
# wrapper
# ---------------------------------------------------------------------------

def mlp_forward(x, w_fc, b_fc, w_proj, b_proj, *, tm=None, th=512,
                compute_dtype=jnp.bfloat16, force_tiled=False):
    """x: [B, T, D] float32.  Returns [B, T, D] (eval-mode dropout = identity).

    Weights are stored pre-transposed as [in, out], so the kernel computes
    plain x @ W (identical semantics to nn.Linear's x @ W^T).
    """
    B, T, D = x.shape
    H = w_fc.shape[1]                      # 4 * D
    M = B * T
    bpe = jnp.dtype(compute_dtype).itemsize
    tm_cap = _round_up(M, 8)

    x2d = x.reshape(M, D).astype(compute_dtype)
    w1 = w_fc.astype(compute_dtype)
    w2 = w_proj.astype(compute_dtype)
    b1 = b_fc.reshape(1, H).astype(jnp.float32)
    b2 = b_proj.reshape(1, D).astype(jnp.float32)

    cost = pl.CostEstimate(
        flops=4 * M * D * H,                       # two matmuls, 2*M*D*H each
        transcendentals=M * H,                     # erf
        bytes_accessed=(M * D * bpe + M * D * 4    # x in + f32 out
                        + 2 * D * H * bpe          # both weight matrices
                        + (H + D) * 4))            # biases

    # ---- pick token tile: largest that fits the resident-path VMEM budget.
    if tm is None:
        tm_sel = min(128, tm_cap)
        for cand in (1024, 512, 256, 128):
            t = min(cand, tm_cap)
            if _resident_vmem_bytes(t, D, H, bpe) <= _RESIDENT_VMEM_BUDGET:
                tm_sel = t
                break
        tm = tm_sel
    else:
        tm = min(tm, tm_cap)

    resident_est = _resident_vmem_bytes(tm, D, H, bpe)
    use_resident = (resident_est <= _RESIDENT_VMEM_BUDGET) and not force_tiled

    if use_resident:
        # -- fast path: weights fully resident in VMEM, 1-D grid over tokens.
        vmem_limit = int(min(max(resident_est + (8 << 20), 32 << 20),
                             _VMEM_LIMIT_CAP))
        out2d = pl.pallas_call(
            mlp_kernel_resident,
            out_shape=jax.ShapeDtypeStruct((M, D), jnp.float32),
            grid_spec=pltpu.PrefetchScalarGridSpec(
                num_scalar_prefetch=0,
                grid=(pl.cdiv(M, tm),),
                in_specs=[
                    pl.BlockSpec((tm, D), lambda i: (i, 0)),   # x tile
                    pl.BlockSpec((D, H), lambda i: (0, 0)),    # W_fc (resident)
                    pl.BlockSpec((1, H), lambda i: (0, 0)),    # b_fc (resident)
                    pl.BlockSpec((H, D), lambda i: (0, 0)),    # W_proj (resident)
                    pl.BlockSpec((1, D), lambda i: (0, 0)),    # b_proj (resident)
                ],
                out_specs=pl.BlockSpec((tm, D), lambda i: (i, 0)),
            ),
            compiler_params=pltpu.CompilerParams(
                dimension_semantics=("parallel",),
                vmem_limit_bytes=vmem_limit),
            cost_estimate=cost,
        )(x2d, w1, b1, w2, b2)
    else:
        # -- fallback: hidden dim tiled as an f32-accumulated reduction.
        tm = min(tm, 256, tm_cap)
        th = _pick_th(H, th)
        tiled_est = (2 * (tm * D * bpe + D * th * bpe + th * D * bpe
                          + th * 4 + D * 4)
                     + 2 * tm * D * 4        # output double-buffer
                     + tm * D * 4            # accumulator scratch
                     + 2 * tm * th * 4)      # pre / act intermediates
        vmem_limit = int(min(max(tiled_est + (8 << 20), 32 << 20),
                             _VMEM_LIMIT_CAP))
        out2d = pl.pallas_call(
            mlp_kernel_tiled,
            out_shape=jax.ShapeDtypeStruct((M, D), jnp.float32),
            grid_spec=pltpu.PrefetchScalarGridSpec(
                num_scalar_prefetch=0,
                grid=(pl.cdiv(M, tm), H // th),
                in_specs=[
                    pl.BlockSpec((tm, D), lambda i, h: (i, 0)),   # x tile
                    pl.BlockSpec((D, th), lambda i, h: (0, h)),   # W_fc tile
                    pl.BlockSpec((1, th), lambda i, h: (0, h)),   # b_fc tile
                    pl.BlockSpec((th, D), lambda i, h: (h, 0)),   # W_proj tile
                    pl.BlockSpec((1, D), lambda i, h: (0, 0)),    # b_proj
                ],
                out_specs=pl.BlockSpec((tm, D), lambda i, h: (i, 0)),
                scratch_shapes=[pltpu.VMEM((tm, D), jnp.float32)],
            ),
            compiler_params=pltpu.CompilerParams(
                dimension_semantics=("parallel", "arbitrary"),
                vmem_limit_bytes=vmem_limit),
            cost_estimate=cost,
        )(x2d, w1, b1, w2, b2)

    # TODO(synk): training-mode dropout (p>0) not implemented; eval-mode identity.
    return out2d.reshape(B, T, D).astype(x.dtype)


# ---------------------------------------------------------------------------
# references / checks
# ---------------------------------------------------------------------------

def _init_params(key, n_embd):
    """Deterministic init mimicking nn.Linear default (uniform +/- 1/sqrt(fan_in))."""
    k1, k2, k3, k4 = jax.random.split(key, 4)
    H = 4 * n_embd
    bound_fc = 1.0 / math.sqrt(n_embd)
    bound_pr = 1.0 / math.sqrt(H)
    # stored as [in, out] (transposed relative to torch's [out, in])
    w_fc = jax.random.uniform(k1, (n_embd, H), jnp.float32, -bound_fc, bound_fc)
    b_fc = jax.random.uniform(k2, (H,), jnp.float32, -bound_fc, bound_fc)
    w_proj = jax.random.uniform(k3, (H, n_embd), jnp.float32, -bound_pr, bound_pr)
    b_proj = jax.random.uniform(k4, (n_embd,), jnp.float32, -bound_pr, bound_pr)
    return w_fc, b_fc, w_proj, b_proj


def _reference_bf16(x, w_fc, b_fc, w_proj, b_proj):
    """Reference with the same bf16-operand / f32-accumulate numerics."""
    B, T, D = x.shape
    xb = x.reshape(-1, D).astype(jnp.bfloat16)
    h = jnp.dot(xb, w_fc.astype(jnp.bfloat16),
                preferred_element_type=jnp.float32) + b_fc
    h = _gelu_exact(h)
    o = jnp.dot(h.astype(jnp.bfloat16), w_proj.astype(jnp.bfloat16),
                preferred_element_type=jnp.float32) + b_proj
    return o.reshape(B, T, D)


def _reference_f32(x, w_fc, b_fc, w_proj, b_proj):
    h = jnp.einsum("btd,dh->bth", x, w_fc) + b_fc
    h = _gelu_exact(h)
    return jnp.einsum("bth,hd->btd", h, w_proj) + b_proj


def _check(B, T, D, key, force_tiled=False):
    kx, kp = jax.random.split(key)
    x = jax.random.normal(kx, (B, T, D), jnp.float32)
    w_fc, b_fc, w_proj, b_proj = _init_params(kp, D)

    fwd = functools.partial(mlp_forward, force_tiled=force_tiled)
    out = jax.block_until_ready(fwd(x, w_fc, b_fc, w_proj, b_proj))
    assert out.shape == (B, T, D)

    ref_b = _reference_bf16(x, w_fc, b_fc, w_proj, b_proj)
    assert jnp.allclose(out, ref_b, atol=2e-3, rtol=2e-3), \
        f"mismatch vs bf16 reference at D={D}, force_tiled={force_tiled}"

    ref_f = _reference_f32(x, w_fc, b_fc, w_proj, b_proj)
    assert jnp.allclose(out, ref_f, atol=8e-2, rtol=8e-2), \
        f"mismatch vs f32 reference at D={D}, force_tiled={force_tiled}"


if __name__ == "__main__":
    key = jax.random.PRNGKey(0)
    k_small, k_big = jax.random.split(key)

    # Small shape consistent with the module (batch=2, seq=8, n_embd=32).
    _check(B=2, T=8, D=32, key=k_small)

    # Lane-dense shape: weights-resident fast path (1-D grid over tokens).
    _check(B=4, T=128, D=256, key=k_big)

    # Same shape forced through the H-tiled reduction fallback path.
    _check(B=4, T=128, D=256, key=k_big, force_tiled=True)

    print("KERNEL_OK")
</pallas_src>

<mosaic_0001>
module attributes {stable_mosaic.version = 11 : i64} {
  func.func @mlp_kernel_resident(%arg0: i32, %arg1: memref<16x32xbf16, #tpu.memory_space<vmem>>, %arg2: memref<32x128xbf16, #tpu.memory_space<vmem>>, %arg3: memref<1x128xf32, #tpu.memory_space<vmem>>, %arg4: memref<128x32xbf16, #tpu.memory_space<vmem>>, %arg5: memref<1x32xf32, #tpu.memory_space<vmem>>, %arg6: memref<16x32xf32, #tpu.memory_space<vmem>>) attributes {dimension_semantics = [#tpu.dimension_semantics<parallel>], iteration_bounds = array<i64: 1>, scalar_prefetch = 0 : i64, scratch_operands = 0 : i64, tpu.core_type = #tpu.core_type<tc>, window_params = [{transform_indices = @transform_0, window_bounds = array<i64: 16, 32>}, {pipeline_mode = #tpu.pipeline_mode<synchronous>, transform_indices = @transform_1, window_bounds = array<i64: 32, 128>}, {pipeline_mode = #tpu.pipeline_mode<synchronous>, transform_indices = @transform_2, window_bounds = array<i64: 1, 128>}, {pipeline_mode = #tpu.pipeline_mode<synchronous>, transform_indices = @transform_3, window_bounds = array<i64: 128, 32>}, {pipeline_mode = #tpu.pipeline_mode<synchronous>, transform_indices = @transform_4, window_bounds = array<i64: 1, 32>}, {transform_indices = @transform_5, window_bounds = array<i64: 16, 32>}]} {
    %c0 = arith.constant 0 : index
    %c0_0 = arith.constant 0 : index
    %0 = vector.load %arg1[%c0, %c0_0] : memref<16x32xbf16, #tpu.memory_space<vmem>>, vector<16x32xbf16>
    %c0_1 = arith.constant 0 : index
    %c0_2 = arith.constant 0 : index
    %1 = vector.load %arg2[%c0_1, %c0_2] : memref<32x128xbf16, #tpu.memory_space<vmem>>, vector<32x128xbf16>
    %cst = arith.constant dense<0.000000e+00> : vector<16x128xf32>
    %2 = tpu.matmul %0, %1, %cst {dimension_numbers = #tpu.dot_dimension_numbers<[1], [0], [0], [1], [0, 0, 1, 1], [], []>} : vector<16x32xbf16>, vector<32x128xbf16>, vector<16x128xf32> -> vector<16x128xf32>
    %c0_3 = arith.constant 0 : index
    %c0_4 = arith.constant 0 : index
    %3 = vector.load %arg3[%c0_3, %c0_4] : memref<1x128xf32, #tpu.memory_space<vmem>>, vector<1x128xf32>
    %4 = vector.broadcast %3 : vector<1x128xf32> to vector<16x128xf32>
    %5 = arith.addf %2, %4 : vector<16x128xf32>
    %cst_5 = arith.constant 5.000000e-01 : f32
    %6 = vector.broadcast %cst_5 : f32 to vector<16x128xf32>
    %7 = arith.mulf %6, %5 : vector<16x128xf32>
    %cst_6 = arith.constant 0.707106769 : f32
    %8 = vector.broadcast %cst_6 : f32 to vector<16x128xf32>
    %9 = arith.mulf %5, %8 : vector<16x128xf32>
    %10 = math.erf %9 : vector<16x128xf32>
    %cst_7 = arith.constant 1.000000e+00 : f32
    %11 = vector.broadcast %cst_7 : f32 to vector<16x128xf32>
    %12 = arith.addf %11, %10 : vector<16x128xf32>
    %13 = arith.mulf %7, %12 : vector<16x128xf32>
    %14 = arith.truncf %13 : vector<16x128xf32> to vector<16x128xbf16>
    %c0_8 = arith.constant 0 : index
    %c0_9 = arith.constant 0 : index
    %15 = vector.load %arg4[%c0_8, %c0_9] : memref<128x32xbf16, #tpu.memory_space<vmem>>, vector<128x32xbf16>
    %cst_10 = arith.constant dense<0.000000e+00> : vector<16x32xf32>
    %16 = tpu.matmul %14, %15, %cst_10 {dimension_numbers = #tpu.dot_dimension_numbers<[1], [0], [0], [1], [0, 0, 1, 1], [], []>} : vector<16x128xbf16>, vector<128x32xbf16>, vector<16x32xf32> -> vector<16x32xf32>
    %c0_11 = arith.constant 0 : index
    %c0_12 = arith.constant 0 : index
    %17 = vector.load %arg5[%c0_11, %c0_12] : memref<1x32xf32, #tpu.memory_space<vmem>>, vector<1x32xf32>
    %18 = vector.broadcast %17 : vector<1x32xf32> to vector<16x32xf32>
    %19 = arith.addf %16, %18 : vector<16x32xf32>
    %c0_13 = arith.constant 0 : index
    %c0_14 = arith.constant 0 : index
    %20 = vector.load %arg6[%c0_13, %c0_14] : memref<16x32xf32, #tpu.memory_space<vmem>>, vector<16x32xf32>
    tpu.vector_store %arg6[%c0_13, %c0_14], %19 {strides = array<i32>} : memref<16x32xf32, #tpu.memory_space<vmem>>, vector<16x32xf32>,
    return
  }
  func.func @transform_0(%arg0: i32) -> (i32, i32) {
    %c0_i32 = arith.constant 0 : i32
    %c0_i32_0 = arith.constant 0 : i32
    return %arg0, %c0_i32 : i32, i32
  }
  func.func @transform_1(%arg0: i32) -> (i32, i32) {
    %c0_i32 = arith.constant 0 : i32
    %c0_i32_0 = arith.constant 0 : i32
    %c0_i32_1 = arith.constant 0 : i32
    return %c0_i32, %c0_i32_0 : i32, i32
  }
  func.func @transform_2(%arg0: i32) -> (i32, i32) {
    %c0_i32 = arith.constant 0 : i32
    %c0_i32_0 = arith.constant 0 : i32
    %c0_i32_1 = arith.constant 0 : i32
    return %c0_i32, %c0_i32_0 : i32, i32
  }
  func.func @transform_3(%arg0: i32) -> (i32, i32) {
    %c0_i32 = arith.constant 0 : i32
    %c0_i32_0 = arith.constant 0 : i32
    %c0_i32_1 = arith.constant 0 : i32
    return %c0_i32, %c0_i32_0 : i32, i32
  }
  func.func @transform_4(%arg0: i32) -> (i32, i32) {
    %c0_i32 = arith.constant 0 : i32
    %c0_i32_0 = arith.constant 0 : i32
    %c0_i32_1 = arith.constant 0 : i32
    return %c0_i32, %c0_i32_0 : i32, i32
  }
  func.func @transform_5(%arg0: i32) -> (i32, i32) {
    %c0_i32 = arith.constant 0 : i32
    %c0_i32_0 = arith.constant 0 : i32
    return %arg0, %c0_i32 : i32, i32
  }
}

</mosaic_0001>

<llo_original>
// kernel: tpu_custom_call.1
$region0: #{tpu_custom_call.1}
  #allocation0 [shape = 'u32[]', space=smem, size = 0x4, offset = 0x4, fixed_abs, tag = 'smem constant byte address 0x4 - core index']
  #allocation1 [shape = 'u32[72,128]{1,0:T(1,128)}', space=vmem, size = 0x9000, scoped, tag = 'internal scratch']
  %s0 = inlined_call_operand.vmem [shape: bf16[16,32], index: 0, kind: input, shape index: {}]
  %s1 = inlined_call_operand.vmem [shape: bf16[32,128], index: 1, kind: input, shape index: {}]
  %s2 = inlined_call_operand.vmem [shape: f32[1,128], index: 2, kind: input, shape index: {}]
  %s3 = inlined_call_operand.vmem [shape: bf16[128,32], index: 3, kind: input, shape index: {}]
  %s4 = inlined_call_operand.vmem [shape: f32[1,32], index: 4, kind: input, shape index: {}]
  %s5 = inlined_call_operand.hbm [shape: f32[16,32], index: 5, kind: output, shape index: {}]
  %s6 = sld [smem:[#allocation0]]
  $region30: #{tpu_custom_call.1} parent=0
    _
  %s8 = ssub.s32 1, %s6
  %s9 = scalar_select 0, %s8, %s6
  $region1: #{tpu_custom_call.1} parent=0
    #allocation2 [shape = 'u8[8192]{0}', space=vmem, size = 0x2000, scoped, tag = 'output window, operand 0, single buffered']
    #allocation3 [shape = 's32[1]{0}', space=sflag, size = 0x4, scoped, tag = 'scoped memory for tpu_custom_call.1']
    %10 = vsyncpa [#allocation3], 0
    // Predicated region
    $region2: #{tpu_custom_call.1} parent=1 // pred_check
      _
    $region3: #{tpu_custom_call.1} parent=1 // pred_check_branch
      %12 = sbr.rel (0) target = $region5
    $region4: #{tpu_custom_call.1} parent=1 // pred_region
      _
    $region5: #{tpu_custom_call.1} parent=1 // pred_fallthru
      _
    // Predicated region
    $region6: #{tpu_custom_call.1} parent=1 // pred_check
      _
    $region7: #{tpu_custom_call.1} parent=1 // pred_check_branch
      %14 = sbr.rel (0) target = $region9
    $region8: #{tpu_custom_call.1} parent=1 // pred_region
      _
    $region9: #{tpu_custom_call.1} parent=1 // pred_fallthru
      _
    // Predicated region
    $region10: #{tpu_custom_call.1} parent=1 // pred_check
      _
    $region11: #{tpu_custom_call.1} parent=1 // pred_check_branch
      %16 = sbr.rel (0) target = $region13
    $region12: #{tpu_custom_call.1} parent=1 // pred_region
      _
    $region13: #{tpu_custom_call.1} parent=1 // pred_fallthru
      _
    // Predicated region
    $region14: #{tpu_custom_call.1} parent=1 // pred_check
      _
    $region15: #{tpu_custom_call.1} parent=1 // pred_check_branch
      %18 = sbr.rel (0) target = $region17
    $region16: #{tpu_custom_call.1} parent=1 // pred_region
      _
    $region17: #{tpu_custom_call.1} parent=1 // pred_fallthru
      _
    // Predicated region
    $region18: #{tpu_custom_call.1} parent=1 // pred_check
      _
    $region19: #{tpu_custom_call.1} parent=1 // pred_check_branch
      %20 = sbr.rel (0) target = $region21
    $region20: #{tpu_custom_call.1} parent=1 // pred_region
      _
    $region21: #{tpu_custom_call.1} parent=1 // pred_fallthru
      _
    %v22 = vld [vmem:[%s0] sm:$0xf]
    %v23 = vld [vmem:[%s0 + $0x4] sm:$0xf]
    %v24 = vld [vmem:[%s1] sm:$0xf]
    %v25 = vld [vmem:[%s1 + $0x4] sm:$0xf]
    %v26 = vld [vmem:[%s1 + $0x8] sm:$0xf]
    %v27 = vld [vmem:[%s1 + $0xc] sm:$0xf]
    %v28 = vld [vmem:[%s2] sm:$0x1]
    %v30 = vperm.slane %v28, 0
    %v34 = vunpack.c.l.b16 %v22
    %v35 = vunpack.c.l.b16 %v23
    %v36 = vpack.c.b16 %v35, %v34
    %v41 = vunpack.c.l.b16 %v24
    %v42 = vunpack.c.l.b16 %v25
    %v43 = vunpack.c.l.b16 %v26
    %v44 = vunpack.c.l.b16 %v27
    %v45 = vpack.c.b16 %v42, %v41
    %v46 = vpack.c.b16 %v44, %v43
    %vm49 = vcmask 261120
    %v51 = vsel %vm49, %v36, 0
    %53 = vmatpush.bf16.msra.mxu0 0
    %54 = vmatpush.bf16.msra.mxu0 0
    %55 = vmatpush.bf16.msra.mxu0 0
    %56 = vmatpush.bf16.msra.mxu0 0
    %57 = vmatpush.bf16.msra.mxu0 0
    %58 = vmatpush.bf16.msra.mxu0 0
    %59 = vmatpush.bf16.msra.mxu0 %v46
    %60 = vmatpush.bf16.msra.mxu0 %v45
    %61 = vmatmul.bf16.gmra.mxu0 %v51
    %v62 = vpop.f32.mrf.mxu0
    %v63 = vadd.f32 %v30, %v62
    %v64 = vpop.f32.mrf.mxu0
    %v65 = vadd.f32 %v30, %v64
    %66 = vdwg.mxu0
    %v67 = vmul.f32 %v63, 0.5
    %v68 = vmul.f32 %v65, 0.5
    %v69 = vmul.f32 %v63, 0.70710677
    %v70 = vmul.f32 %v65, 0.70710677
    %v71 = vmul.f32 %v69, %v69
    %v72 = vmin.f32 16.0, %v71
    %v73 = vmul.f32 %v72, 2.1237322e-06
    %v74 = vadd.f32 %v73, 0.00028619796
    %v75 = vmul.f32 %v72, %v74
    %v76 = vadd.f32 %v75, 0.0036580483
    %v77 = vmul.f32 %v72, %v76
    %v78 = vadd.f32 %v77, 0.05243302
    %v79 = vmul.f32 %v72, %v78
    %v80 = vadd.f32 %v79, 0.18741608
    %v81 = vmul.f32 %v72, %v80
    %v82 = vadd.f32 %v81, 1.1283791
    %v83 = vmul.f32 %v69, %v82
    %v84 = vmul.f32 %v72, 3.8918573e-05
    %v85 = vadd.f32 %v84, 0.001143296
    %v86 = vmul.f32 %v72, %v85
    %v87 = vadd.f32 %v86, 0.014752088
    %v88 = vmul.f32 %v72, %v87
    %v89 = vadd.f32 %v88, 0.112945676
    %v90 = vmul.f32 %v72, %v89
    %v91 = vadd.f32 %v90, 0.4994258
    %v92 = vmul.f32 %v72, %v91
    %v93 = vadd.f32 %v92, 1.0
    %v94 = vrcp.pop %v93
    %v95 = vmul.f32 %v93, %v94
    %v96 = vsub.f32 1.0, %v95
    %v97 = vmul.f32 %v94, %v96
    %v98 = vadd.f32 %v94, %v97
    %vm99 = vweird.f32 %v93
    %vm100 = vweird.f32 %v94
    %vm101 = vmor %vm99, %vm100
    %v102 = vsel %vm101, %v94, %v98
    %v103 = vand.u32 2147483647, %v93
    %vm104 = vcmp.eq.f32.partialorder %v103, 8.507059e+37
    %v105 = vand.u32 %v93, 2147483648
    %v106 = vor.u32 1.1754944e-38, %v105
    %v107 = vsel %vm104, %v106, %v102
    %v108 = vmul.f32 %v83, %v107
    %v109 = vmin.f32 %v108, 1.0
    %v110 = vmax.f32 %v109, -1.0
    %v111 = vmul.f32 %v70, %v70
    %v112 = vmin.f32 16.0, %v111
    %v113 = vmul.f32 %v112, 2.1237322e-06
    %v114 = vadd.f32 %v113, 0.00028619796
    %v115 = vmul.f32 %v112, %v114
    %v116 = vadd.f32 %v115, 0.0036580483
    %v117 = vmul.f32 %v112, %v116
    %v118 = vadd.f32 %v117, 0.05243302
    %v119 = vmul.f32 %v112, %v118
    %v120 = vadd.f32 %v119, 0.18741608
    %v121 = vmul.f32 %v112, %v120
    %v122 = vadd.f32 %v121, 1.1283791
    %v123 = vmul.f32 %v70, %v122
    %v124 = vmul.f32 %v112, 3.8918573e-05
    %v125 = vadd.f32 %v124, 0.001143296
    %v126 = vmul.f32 %v112, %v125
    %v127 = vadd.f32 %v126, 0.014752088
    %v128 = vmul.f32 %v112, %v127
    %v129 = vadd.f32 %v128, 0.112945676
    %v130 = vmul.f32 %v112, %v129
    %v131 = vadd.f32 %v130, 0.4994258
    %v132 = vmul.f32 %v112, %v131
    %v133 = vadd.f32 %v132, 1.0
    %v134 = vrcp.pop %v133
    %v135 = vmul.f32 %v133, %v134
    %v136 = vsub.f32 1.0, %v135
    %v137 = vmul.f32 %v134, %v136
    %v138 = vadd.f32 %v134, %v137
    %vm139 = vweird.f32 %v133
    %vm140 = vweird.f32 %v134
    %vm141 = vmor %vm139, %vm140
    %v142 = vsel %vm141, %v134, %v138
    %v143 = vand.u32 2147483647, %v133
    %vm144 = vcmp.eq.f32.partialorder %v143, 8.507059e+37
    %v145 = vand.u32 %v133, 2147483648
    %v146 = vor.u32 1.1754944e-38, %v145
    %v147 = vsel %vm144, %v146, %v142
    %v148 = vmul.f32 %v123, %v147
    %v149 = vmin.f32 %v148, 1.0
    %v150 = vmax.f32 %v149, -1.0
    %v151 = vadd.f32 %v110, 1.0
    %v152 = vadd.f32 %v150, 1.0
    %v153 = vmul.f32 %v67, %v151
    %v154 = vmul.f32 %v68, %v152
    %v155 = vpack.c.bf16 %v154, %v153
    %v156 = vld [vmem:[%s3] sm:$0xf]
    %v157 = vld [vmem:[%s3 + $0x4] sm:$0xf]
    %v158 = vld [vmem:[%s3 + $0x8] sm:$0xf]
    %v159 = vld [vmem:[%s3 + $0xc] sm:$0xf]
    %v160 = vld [vmem:[%s3 + $0x10] sm:$0xf]
    %v161 = vld [vmem:[%s3 + $0x14] sm:$0xf]
    %v162 = vld [vmem:[%s3 + $0x18] sm:$0xf]
    %v163 = vld [vmem:[%s3 + $0x1c] sm:$0xf]
    %v164 = vld [vmem:[%s3 + $0x20] sm:$0xf]
    %v165 = vld [vmem:[%s3 + $0x24] sm:$0xf]
    %v166 = vld [vmem:[%s3 + $0x28] sm:$0xf]
    %v167 = vld [vmem:[%s3 + $0x2c] sm:$0xf]
    %v168 = vld [vmem:[%s3 + $0x30] sm:$0xf]
    %v169 = vld [vmem:[%s3 + $0x34] sm:$0xf]
    %v170 = vld [vmem:[%s3 + $0x38] sm:$0xf]
    %v171 = vld [vmem:[%s3 + $0x3c] sm:$0xf]
    %v172 = vld [vmem:[%s4] sm:$0x1]
    %v174 = vperm.slane %v172, 0
    %v192 = vunpack.c.l.b16 %v156
    %v193 = vunpack.c.l.b16 %v157
    %v194 = vunpack.c.l.b16 %v158
    %v195 = vunpack.c.l.b16 %v159
    %v196 = vunpack.c.l.b16 %v160
    %v197 = vunpack.c.l.b16 %v161
    %v198 = vunpack.c.l.b16 %v162
    %v199 = vunpack.c.l.b16 %v163
    %v200 = vunpack.c.l.b16 %v164
    %v201 = vunpack.c.l.b16 %v165
    %v202 = vunpack.c.l.b16 %v166
    %v203 = vunpack.c.l.b16 %v167
    %v204 = vunpack.c.l.b16 %v168
    %v205 = vunpack.c.l.b16 %v169
    %v206 = vunpack.c.l.b16 %v170
    %v207 = vunpack.c.l.b16 %v171
    %v208 = vpack.c.b16 %v193, %v192
    %v209 = vpack.c.b16 %v195, %v194
    %v210 = vpack.c.b16 %v197, %v196
    %v211 = vpack.c.b16 %v199, %v198
    %v212 = vpack.c.b16 %v201, %v200
    %v213 = vpack.c.b16 %v203, %v202
    %v214 = vpack.c.b16 %v205, %v204
    %v215 = vpack.c.b16 %v207, %v206
    %224 = vmatpush.bf16.msra.mxu0 %v215
    %225 = vmatpush.bf16.msra.mxu0 %v214
    %226 = vmatpush.bf16.msra.mxu0 %v213
    %227 = vmatpush.bf16.msra.mxu0 %v212
    %228 = vmatpush.bf16.msra.mxu0 %v211
    %229 = vmatpush.bf16.msra.mxu0 %v210
    %230 = vmatpush.bf16.msra.mxu0 %v209
    %231 = vmatpush.bf16.msra.mxu0 %v208
    %232 = vmatmul.bf16.gmra.mxu0 %v155
    %v233 = vpop.f32.mrf.mxu0
    %v234 = vadd.f32 %v174, %v233
    %v235 = vpop.f32.mrf.mxu0
    %v236 = vadd.f32 %v174, %v235
    %237 = vdwg.mxu0
    %238 = vst.msk [vmem:[#allocation2] sm:$0xff] %vm49, %v234
    %239 = vst.msk [vmem:[#allocation2 + $0x8] sm:$0xff] %vm49, %v236
    // Predicated region
    $region22: #{tpu_custom_call.1} parent=1 // pred_check
      _
    $region23: #{tpu_custom_call.1} parent=1 // pred_check_branch
      %241 = sbr.rel (0) target = $region25
    $region24: #{tpu_custom_call.1} parent=1 // pred_region
      %243 = vsyncadd [#allocation3], 0
      %s244 = sshll.u32 [#allocation2], 4
      %s245 = int_to_ptr.vmem [resolvable:$true] %s244
      %s246 = sshll.u32 %s5, 4
      %s247 = int_to_ptr.hbm [resolvable:$true] %s246
      %252 = dma.vmem_to_hbm [thread:$0]  %s245, 256, %s247, [#allocation3], 128, 128, 8
    $region25: #{tpu_custom_call.1} parent=1 // pred_fallthru
      _
    // Predicated region
    $region26: #{tpu_custom_call.1} parent=1 // pred_check
      _
    $region27: #{tpu_custom_call.1} parent=1 // pred_check_branch
      %254 = sbr.rel (0) target = $region29
    $region28: #{tpu_custom_call.1} parent=1 // pred_region
      %256 = dma.done [#allocation3], 256
    $region29: #{tpu_custom_call.1} parent=1 // pred_fallthru
      _
    %257 = vsyncpa [#allocation3], 1

</llo_original>
